<compile_context>
chip_gen: v7x
topology: tpu7x:2x2x1
jax: 0.10.0
libtpu: 0.0.40
codegen_flags: <defaults>
</compile_context>

<pallas_src>
import functools

import jax
import jax.numpy as jnp
from jax.experimental import pallas as pl
from jax.experimental.pallas import tpu as pltpu


def _round_up(n, m):
    return (n + m - 1) // m * m


def _cdiv(a, b):
    return -(-a // b)


def _vmem_cap_bytes():
    """Per-generation cap for the scoped-VMEM request."""
    try:
        kind = jax.devices()[0].device_kind.lower()
    except Exception:  # pragma: no cover - defensive
        kind = ""
    if ("v5" in kind) or ("v6" in kind):
        return 112 * 1024 * 1024          # 128 MiB physical VMEM
    return 56 * 1024 * 1024               # v7x: 64 MiB/TC physical, leave headroom


def _ffn_kernel(x_ref, w1_ref, b1_ref, w2_ref, b2_ref, g_ref, beta_ref,
                o_ref, acc_ref, *, eps):
    k = pl.program_id(1)
    nk = pl.num_programs(1)

    xv = x_ref[...]                                              # (tm, d_hid)

    # w_1 slice (1x1 conv) + bias + ReLU, fused; only the bf16 h stays live
    # into the second matmul (keeps VMEM/vreg pressure down).
    h = jnp.maximum(
        jnp.dot(xv.astype(w1_ref.dtype), w1_ref[...],
                preferred_element_type=jnp.float32) + b1_ref[...],
        0.0,
    ).astype(w2_ref.dtype)                                       # (tm, tk)

    # Partial w_2 contribution for this d_inner tile, accumulated in f32.
    part = jnp.dot(h, w2_ref[...], preferred_element_type=jnp.float32)

    @pl.when(k == 0)
    def _():
        acc_ref[...] = part

    @pl.when(k != 0)
    def _():
        acc_ref[...] += part

    @pl.when(k == nk - 1)
    def _():
        # TODO(synk): dropout is identity here (eval mode); training-mode
        # dropout would need pltpu.prng_seed + pltpu.prng_random_bits.
        z = acc_ref[...] + b2_ref[...] + xv.astype(jnp.float32)  # residual
        inv_n = 1.0 / z.shape[-1]
        mu = jnp.sum(z, axis=-1, keepdims=True) * inv_n
        ex2 = jnp.sum(z * z, axis=-1, keepdims=True) * inv_n
        var = jnp.maximum(ex2 - mu * mu, 0.0)                    # one-pass stats
        norm = (z - mu) * jax.lax.rsqrt(var + eps)               # rsqrt -> EUP
        o_ref[...] = (norm * g_ref[...] + beta_ref[...]).astype(o_ref.dtype)


@functools.partial(
    jax.jit,
    static_argnames=("tm", "eps", "compute_dtype", "out_dtype",
                     "weight_vmem_budget"))
def positionwise_ffn(x, w1, b1, w2, b2, gamma, beta, *,
                     tm=512, eps=1e-5, compute_dtype=jnp.bfloat16,
                     out_dtype=None,
                     weight_vmem_budget=16 * 1024 * 1024):
    """x: (batch, seq, d_hid) -> (batch, seq, d_hid).

    W1: (d_hid, d_inner), W2: (d_inner, d_hid) -- k=1 Conv1d weights in
    matmul form.  eps defaults to 1e-5 (nn.LayerNorm default); pass the
    module's actual epsilon if it differs.
    """
    B, S, d_hid = x.shape
    d_inner = w1.shape[1]
    M = B * S
    out_dtype = x.dtype if out_dtype is None else out_dtype
    itemsize_c = jnp.dtype(compute_dtype).itemsize

    # ---- Row tile: multiple of 8, capped so the row grid has >= 2 steps ----
    tm_eff = min(_round_up(tm, 8), _round_up(_cdiv(M, 2), 8))
    tm_eff = max(tm_eff, 8)
    nrow = _cdiv(M, tm_eff)

    # ---- d_inner (K) tile: keep per-step weight blocks within budget -------
    full_w_bytes = 2 * d_hid * d_inner * itemsize_c
    if full_w_bytes <= weight_vmem_budget:
        tk = d_inner
    else:
        tk = weight_vmem_budget // (4 * d_hid * itemsize_c)   # 2 bufs * (W1+W2)
        tk = max(128, (tk // 128) * 128)
        tk = min(tk, _round_up(d_inner, 128))
    nk = _cdiv(d_inner, tk)
    d_inner_pad = nk * tk

    # ---- Host-side operand prep (weights only; x is never copied) ----------
    x2d = x.reshape(M, d_hid)
    w1_c = w1.astype(compute_dtype)
    w2_c = w2.astype(compute_dtype)
    b1_f = b1.reshape(1, d_inner).astype(jnp.float32)
    if d_inner_pad != d_inner:
        pad = d_inner_pad - d_inner
        # Zero padding is exact: relu(0*x + 0) = 0 contributes nothing via the
        # zero-padded W2 rows.
        w1_c = jnp.pad(w1_c, ((0, 0), (0, pad)))
        w2_c = jnp.pad(w2_c, ((0, pad), (0, 0)))
        b1_f = jnp.pad(b1_f, ((0, 0), (0, pad)))
    b2_f = b2.reshape(1, d_hid).astype(jnp.float32)
    g_f = gamma.reshape(1, d_hid).astype(jnp.float32)
    beta_f = beta.reshape(1, d_hid).astype(jnp.float32)

    # ---- BlockSpecs ---------------------------------------------------------
    # Weights are single-buffered when they are fully resident (nk == 1);
    # double-buffered (default) when they stream along the k axis.
    def w_spec(shape, imap):
        if nk == 1:
            return pl.BlockSpec(shape, imap, pipeline_mode=pl.Buffered(1))
        return pl.BlockSpec(shape, imap)

    const_spec = lambda shape: pl.BlockSpec(shape, lambda i, k: (0, 0),
                                            pipeline_mode=pl.Buffered(1))

    in_specs = [
        pl.BlockSpec((tm_eff, d_hid), lambda i, k: (i, 0)),      # x rows
        w_spec((d_hid, tk), lambda i, k: (0, k)),                # W1 block (bf16)
        w_spec((1, tk), lambda i, k: (0, k)),                    # b1 block (f32)
        w_spec((tk, d_hid), lambda i, k: (k, 0)),                # W2 block (bf16)
        const_spec((1, d_hid)),                                  # b2
        const_spec((1, d_hid)),                                  # gamma
        const_spec((1, d_hid)),                                  # beta
    ]
    out_specs = pl.BlockSpec((tm_eff, d_hid), lambda i, k: (i, 0))

    # ---- VMEM limit derived from the actual working set --------------------
    nbuf_w = 1 if nk == 1 else 2
    x_item = x2d.dtype.itemsize
    o_item = jnp.dtype(out_dtype).itemsize
    work_bytes = (
        2 * tm_eff * d_hid * x_item                    # x (double-buffered)
        + 2 * tm_eff * d_hid * o_item                  # out (double-buffered)
        + nbuf_w * 2 * d_hid * tk * itemsize_c         # W1 + W2 blocks
        + nbuf_w * 8 * tk * 4                          # b1 block (8-sublane pad)
        + 3 * 8 * d_hid * 4                            # b2 / gamma / beta
        + tm_eff * d_hid * 4                           # acc scratch
        + tm_eff * tk * (4 + itemsize_c)               # live h (f32 + bf16)
    )
    vmem_limit = int(min(max(int(work_bytes * 1.25) + (4 << 20), 16 << 20),
                         _vmem_cap_bytes()))

    weight_fetch_bytes = full_w_bytes * (1 if nk == 1 else nrow)
    io_bytes = M * d_hid * (x_item + o_item)
    cost = pl.CostEstimate(
        flops=4 * M * d_hid * d_inner + 10 * M * d_hid,
        transcendentals=M,
        bytes_accessed=io_bytes + weight_fetch_bytes,
    )

    kernel = functools.partial(_ffn_kernel, eps=eps)

    out2d = pl.pallas_call(
        kernel,
        out_shape=jax.ShapeDtypeStruct((M, d_hid), out_dtype),
        grid_spec=pltpu.PrefetchScalarGridSpec(
            num_scalar_prefetch=0,
            grid=(nrow, nk),                      # reduction (k) axis last
            in_specs=in_specs,
            out_specs=out_specs,
            scratch_shapes=[pltpu.VMEM((tm_eff, d_hid), jnp.float32)],
        ),
        compiler_params=pltpu.CompilerParams(
            dimension_semantics=("parallel", "arbitrary"),
            vmem_limit_bytes=vmem_limit,
        ),
        cost_estimate=cost,
    )(x2d, w1_c, b1_f, w2_c, b2_f, g_f, beta_f)

    return out2d.reshape(B, S, d_hid)


def _reference(x, w1, b1, w2, b2, gamma, beta, eps=1e-5,
               compute_dtype=jnp.bfloat16):
    """Pure-JAX reference mirroring the kernel's bf16-matmul / f32-LN math."""
    xb = x.astype(compute_dtype)
    h = jnp.einsum("bsd,df->bsf", xb, w1.astype(compute_dtype),
                   preferred_element_type=jnp.float32) + b1
    h = jnp.maximum(h, 0.0)
    y = jnp.einsum("bsf,fd->bsd", h.astype(compute_dtype),
                   w2.astype(compute_dtype),
                   preferred_element_type=jnp.float32) + b2
    z = y + x.astype(jnp.float32)
    mu = jnp.mean(z, axis=-1, keepdims=True)
    var = jnp.mean((z - mu) ** 2, axis=-1, keepdims=True)
    return (z - mu) * jax.lax.rsqrt(var + eps) * gamma + beta


if __name__ == "__main__":
    batch, d_hid = 2, 128
    key = jax.random.PRNGKey(0)

    # (seq, d_inner, weight_vmem_budget).  The default budget keeps the
    # weights VMEM-resident (nk=1); the tiny budgets force the d_inner-tiled
    # accumulator path (nk>1), including the zero-padded-tail case.
    configs = [
        (8, 256, 16 * 1024 * 1024),   # aligned rows, resident weights (nk=1)
        (7, 256, 16 * 1024 * 1024),   # partial last row block (M=14)
        (8, 256, 64 * 1024),          # forced d_inner tiling: tk=128, nk=2
        (7, 192, 64 * 1024),          # tiling + zero-padded d_inner tail
    ]

    for idx, (seq, d_inner, budget) in enumerate(configs):
        k0 = jax.random.fold_in(key, idx)
        kx, k1, k2, k3, k4 = jax.random.split(k0, 5)

        x = jax.random.normal(kx, (batch, seq, d_hid), dtype=jnp.float32)
        # Conv1d-with-k=1 weights stored in matmul form:
        # W1 (d_hid, d_inner), W2 (d_inner, d_hid).
        w1 = jax.random.normal(k1, (d_hid, d_inner), dtype=jnp.float32) * 0.05
        b1 = jax.random.normal(k2, (d_inner,), dtype=jnp.float32) * 0.01
        w2 = jax.random.normal(k3, (d_inner, d_hid), dtype=jnp.float32) * 0.05
        b2 = jax.random.normal(k4, (d_hid,), dtype=jnp.float32) * 0.01
        gamma = jnp.ones((d_hid,), dtype=jnp.float32)
        beta = jnp.zeros((d_hid,), dtype=jnp.float32)

        out = jax.block_until_ready(
            positionwise_ffn(x, w1, b1, w2, b2, gamma, beta,
                             weight_vmem_budget=budget))
        ref = _reference(x, w1, b1, w2, b2, gamma, beta)

        assert out.shape == (batch, seq, d_hid)
        err = float(jnp.max(jnp.abs(out - ref)))
        assert jnp.allclose(out, ref, atol=5e-3, rtol=5e-3), (
            f"mismatch vs reference (seq={seq}, d_inner={d_inner}, "
            f"budget={budget}): max abs err {err:.3e}")

    print("KERNEL_OK")
</pallas_src>

<mosaic_0001>
module attributes {stable_mosaic.version = 11 : i64} {
  func.func @_ffn_kernel(%arg0: i32, %arg1: i32, %arg2: memref<8x128xf32, #tpu.memory_space<vmem>>, %arg3: memref<128x256xbf16, #tpu.memory_space<vmem>>, %arg4: memref<1x256xf32, #tpu.memory_space<vmem>>, %arg5: memref<256x128xbf16, #tpu.memory_space<vmem>>, %arg6: memref<1x128xf32, #tpu.memory_space<vmem>>, %arg7: memref<1x128xf32, #tpu.memory_space<vmem>>, %arg8: memref<1x128xf32, #tpu.memory_space<vmem>>, %arg9: memref<8x128xf32, #tpu.memory_space<vmem>>, %arg10: memref<8x128xf32, #tpu.memory_space<vmem>>) attributes {dimension_semantics = [#tpu.dimension_semantics<parallel>, #tpu.dimension_semantics<arbitrary>], iteration_bounds = array<i64: 2, 1>, scalar_prefetch = 0 : i64, scratch_operands = 1 : i64, tpu.core_type = #tpu.core_type<tc>, window_params = [{transform_indices = @transform_0, window_bounds = array<i64: 8, 128>}, {pipeline_mode = #tpu.pipeline_mode<synchronous>, transform_indices = @transform_1, window_bounds = array<i64: 128, 256>}, {pipeline_mode = #tpu.pipeline_mode<synchronous>, transform_indices = @transform_2, window_bounds = array<i64: 1, 256>}, {pipeline_mode = #tpu.pipeline_mode<synchronous>, transform_indices = @transform_3, window_bounds = array<i64: 256, 128>}, {pipeline_mode = #tpu.pipeline_mode<synchronous>, transform_indices = @transform_4, window_bounds = array<i64: 1, 128>}, {pipeline_mode = #tpu.pipeline_mode<synchronous>, transform_indices = @transform_5, window_bounds = array<i64: 1, 128>}, {pipeline_mode = #tpu.pipeline_mode<synchronous>, transform_indices = @transform_6, window_bounds = array<i64: 1, 128>}, {transform_indices = @transform_7, window_bounds = array<i64: 8, 128>}]} {
    %c0 = arith.constant 0 : index
    %c0_0 = arith.constant 0 : index
    %0 = vector.load %arg2[%c0, %c0_0] : memref<8x128xf32, #tpu.memory_space<vmem>>, vector<8x128xf32>
    %1 = arith.truncf %0 : vector<8x128xf32> to vector<8x128xbf16>
    %c0_1 = arith.constant 0 : index
    %c0_2 = arith.constant 0 : index
    %2 = vector.load %arg3[%c0_1, %c0_2] : memref<128x256xbf16, #tpu.memory_space<vmem>>, vector<128x256xbf16>
    %cst = arith.constant dense<0.000000e+00> : vector<8x256xf32>
    %3 = tpu.matmul %1, %2, %cst {dimension_numbers = #tpu.dot_dimension_numbers<[1], [0], [0], [1], [0, 0, 1, 1], [], []>} : vector<8x128xbf16>, vector<128x256xbf16>, vector<8x256xf32> -> vector<8x256xf32>
    %c0_3 = arith.constant 0 : index
    %c0_4 = arith.constant 0 : index
    %4 = vector.load %arg4[%c0_3, %c0_4] : memref<1x256xf32, #tpu.memory_space<vmem>>, vector<1x256xf32>
    %5 = vector.broadcast %4 : vector<1x256xf32> to vector<8x256xf32>
    %6 = arith.addf %3, %5 : vector<8x256xf32>
    %cst_5 = arith.constant 0.000000e+00 : f32
    %7 = vector.broadcast %cst_5 : f32 to vector<8x256xf32>
    %8 = arith.maximumf %6, %7 : vector<8x256xf32>
    %9 = arith.truncf %8 : vector<8x256xf32> to vector<8x256xbf16>
    %c0_6 = arith.constant 0 : index
    %c0_7 = arith.constant 0 : index
    %10 = vector.load %arg5[%c0_6, %c0_7] : memref<256x128xbf16, #tpu.memory_space<vmem>>, vector<256x128xbf16>
    %cst_8 = arith.constant dense<0.000000e+00> : vector<8x128xf32>
    %11 = tpu.matmul %9, %10, %cst_8 {dimension_numbers = #tpu.dot_dimension_numbers<[1], [0], [0], [1], [0, 0, 1, 1], [], []>} : vector<8x256xbf16>, vector<256x128xbf16>, vector<8x128xf32> -> vector<8x128xf32>
    %c0_i32 = arith.constant 0 : i32
    %12 = arith.cmpi eq, %arg1, %c0_i32 : i32
    %13 = arith.extui %12 : i1 to i32
    %c0_i32_9 = arith.constant 0 : i32
    %14 = arith.cmpi ne, %13, %c0_i32_9 : i32
    scf.if %14 {
      %c0_14 = arith.constant 0 : index
      %c0_15 = arith.constant 0 : index
      %21 = vector.load %arg10[%c0_14, %c0_15] : memref<8x128xf32, #tpu.memory_space<vmem>>, vector<8x128xf32>
      tpu.vector_store %arg10[%c0_14, %c0_15], %11 {strides = array<i32>} : memref<8x128xf32, #tpu.memory_space<vmem>>, vector<8x128xf32>,
    } else {
    }
    %c0_i32_10 = arith.constant 0 : i32
    %15 = arith.cmpi ne, %arg1, %c0_i32_10 : i32
    %16 = arith.extui %15 : i1 to i32
    %c0_i32_11 = arith.constant 0 : i32
    %17 = arith.cmpi ne, %16, %c0_i32_11 : i32
    scf.if %17 {
      %c0_14 = arith.constant 0 : index
      %c0_15 = arith.constant 0 : index
      %21 = vector.load %arg10[%c0_14, %c0_15] : memref<8x128xf32, #tpu.memory_space<vmem>>, vector<8x128xf32>
      %22 = arith.addf %21, %11 : vector<8x128xf32>
      %c0_16 = arith.constant 0 : index
      %c0_17 = arith.constant 0 : index
      %23 = vector.load %arg10[%c0_16, %c0_17] : memref<8x128xf32, #tpu.memory_space<vmem>>, vector<8x128xf32>
      tpu.vector_store %arg10[%c0_16, %c0_17], %22 {strides = array<i32>} : memref<8x128xf32, #tpu.memory_space<vmem>>, vector<8x128xf32>,
    } else {
    }
    %c0_i32_12 = arith.constant 0 : i32
    %18 = arith.cmpi eq, %arg1, %c0_i32_12 : i32
    %19 = arith.extui %18 : i1 to i32
    %c0_i32_13 = arith.constant 0 : i32
    %20 = arith.cmpi ne, %19, %c0_i32_13 : i32
    scf.if %20 {
      %c0_14 = arith.constant 0 : index
      %c0_15 = arith.constant 0 : index
      %21 = vector.load %arg10[%c0_14, %c0_15] : memref<8x128xf32, #tpu.memory_space<vmem>>, vector<8x128xf32>
      %c0_16 = arith.constant 0 : index
      %c0_17 = arith.constant 0 : index
      %22 = vector.load %arg6[%c0_16, %c0_17] : memref<1x128xf32, #tpu.memory_space<vmem>>, vector<1x128xf32>
      %23 = vector.broadcast %22 : vector<1x128xf32> to vector<8x128xf32>
      %24 = arith.addf %21, %23 : vector<8x128xf32>
      %25 = arith.addf %24, %0 : vector<8x128xf32>
      %cst_18 = arith.constant dense<0.000000e+00> : vector<8xf32>
      %26 = vector.multi_reduction <add>, %25, %cst_18 [1] : vector<8x128xf32> to vector<8xf32>
      %27 = vector.shape_cast %26 : vector<8xf32> to vector<8x1xf32>
      %cst_19 = arith.constant 7.812500e-03 : f32
      %28 = vector.broadcast %cst_19 : f32 to vector<8x1xf32>
      %29 = arith.mulf %27, %28 : vector<8x1xf32>
      %30 = arith.mulf %25, %25 : vector<8x128xf32>
      %cst_20 = arith.constant dense<0.000000e+00> : vector<8xf32>
      %31 = vector.multi_reduction <add>, %30, %cst_20 [1] : vector<8x128xf32> to vector<8xf32>
      %32 = vector.shape_cast %31 : vector<8xf32> to vector<8x1xf32>
      %cst_21 = arith.constant 7.812500e-03 : f32
      %33 = vector.broadcast %cst_21 : f32 to vector<8x1xf32>
      %34 = arith.mulf %32, %33 : vector<8x1xf32>
      %35 = arith.mulf %29, %29 : vector<8x1xf32>
      %36 = arith.subf %34, %35 : vector<8x1xf32>
      %cst_22 = arith.constant 0.000000e+00 : f32
      %37 = vector.broadcast %cst_22 : f32 to vector<8x1xf32>
      %38 = arith.maximumf %36, %37 : vector<8x1xf32>
      %39 = vector.broadcast %29 : vector<8x1xf32> to vector<8x128xf32>
      %40 = arith.subf %25, %39 : vector<8x128xf32>
      %cst_23 = arith.constant 9.99999974E-6 : f32
      %41 = vector.broadcast %cst_23 : f32 to vector<8x1xf32>
      %42 = arith.addf %38, %41 : vector<8x1xf32>
      %43 = math.rsqrt %42 : vector<8x1xf32>
      %44 = vector.broadcast %43 : vector<8x1xf32> to vector<8x128xf32>
      %45 = arith.mulf %40, %44 : vector<8x128xf32>
      %c0_24 = arith.constant 0 : index
      %c0_25 = arith.constant 0 : index
      %46 = vector.load %arg7[%c0_24, %c0_25] : memref<1x128xf32, #tpu.memory_space<vmem>>, vector<1x128xf32>
      %47 = vector.broadcast %46 : vector<1x128xf32> to vector<8x128xf32>
      %48 = arith.mulf %45, %47 : vector<8x128xf32>
      %c0_26 = arith.constant 0 : index
      %c0_27 = arith.constant 0 : index
      %49 = vector.load %arg8[%c0_26, %c0_27] : memref<1x128xf32, #tpu.memory_space<vmem>>, vector<1x128xf32>
      %50 = vector.broadcast %49 : vector<1x128xf32> to vector<8x128xf32>
      %51 = arith.addf %48, %50 : vector<8x128xf32>
      %c0_28 = arith.constant 0 : index
      %c0_29 = arith.constant 0 : index
      %52 = vector.load %arg9[%c0_28, %c0_29] : memref<8x128xf32, #tpu.memory_space<vmem>>, vector<8x128xf32>
      tpu.vector_store %arg9[%c0_28, %c0_29], %51 {strides = array<i32>} : memref<8x128xf32, #tpu.memory_space<vmem>>, vector<8x128xf32>,
    } else {
    }
    return
  }
  func.func @transform_0(%arg0: i32, %arg1: i32) -> (i32, i32) {
    %c0_i32 = arith.constant 0 : i32
    %c0_i32_0 = arith.constant 0 : i32
    return %arg0, %c0_i32 : i32, i32
  }
  func.func @transform_1(%arg0: i32, %arg1: i32) -> (i32, i32) {
    %c0_i32 = arith.constant 0 : i32
    %c0_i32_0 = arith.constant 0 : i32
    return %c0_i32, %arg1 : i32, i32
  }
  func.func @transform_2(%arg0: i32, %arg1: i32) -> (i32, i32) {
    %c0_i32 = arith.constant 0 : i32
    %c0_i32_0 = arith.constant 0 : i32
    return %c0_i32, %arg1 : i32, i32
  }
  func.func @transform_3(%arg0: i32, %arg1: i32) -> (i32, i32) {
    %c0_i32 = arith.constant 0 : i32
    %c0_i32_0 = arith.constant 0 : i32
    return %arg1, %c0_i32 : i32, i32
  }
  func.func @transform_4(%arg0: i32, %arg1: i32) -> (i32, i32) {
    %c0_i32 = arith.constant 0 : i32
    %c0_i32_0 = arith.constant 0 : i32
    %c0_i32_1 = arith.constant 0 : i32
    return %c0_i32, %c0_i32_0 : i32, i32
  }
  func.func @transform_5(%arg0: i32, %arg1: i32) -> (i32, i32) {
    %c0_i32 = arith.constant 0 : i32
    %c0_i32_0 = arith.constant 0 : i32
    %c0_i32_1 = arith.constant 0 : i32
    return %c0_i32, %c0_i32_0 : i32, i32
  }
  func.func @transform_6(%arg0: i32, %arg1: i32) -> (i32, i32) {
    %c0_i32 = arith.constant 0 : i32
    %c0_i32_0 = arith.constant 0 : i32
    %c0_i32_1 = arith.constant 0 : i32
    return %c0_i32, %c0_i32_0 : i32, i32
  }
  func.func @transform_7(%arg0: i32, %arg1: i32) -> (i32, i32) {
    %c0_i32 = arith.constant 0 : i32
    %c0_i32_0 = arith.constant 0 : i32
    return %arg0, %c0_i32 : i32, i32
  }
}

</mosaic_0001>

<llo_original>
// kernel: positionwise_ffn.1
$region0: #{positionwise_ffn.1}
  #allocation0 [shape = 'u32[]', space=smem, size = 0x4, offset = 0x4, fixed_abs, tag = 'smem constant byte address 0x4 - core index']
  #allocation1 [shape = 'u32[144,128]{1,0:T(1,128)}', space=vmem, size = 0x12000, scoped, tag = 'internal scratch']
  #allocation2 [shape = 'f32[8,128]{1,0:T(8,128)}', space=vmem, size = 0x1000, scoped, tag = 'scratch operand']
  %s0 = inlined_call_operand.vmem [shape: f32[16,128], index: 0, kind: input, shape index: {}]
  %s1 = inlined_call_operand.vmem [shape: bf16[128,256], index: 1, kind: input, shape index: {}]
  %s2 = inlined_call_operand.vmem [shape: f32[1,256], index: 2, kind: input, shape index: {}]
  %s3 = inlined_call_operand.vmem [shape: bf16[256,128], index: 3, kind: input, shape index: {}]
  %s4 = inlined_call_operand.vmem [shape: f32[1,128], index: 4, kind: input, shape index: {}]
  %s5 = inlined_call_operand.vmem [shape: f32[1,128], index: 5, kind: input, shape index: {}]
  %s6 = inlined_call_operand.vmem [shape: f32[1,128], index: 6, kind: input, shape index: {}]
  %s7 = inlined_call_operand.hbm [shape: f32[16,128], index: 7, kind: output, shape index: {}]
  %s8 = sld [smem:[#allocation0]]
  $region73: #{positionwise_ffn.1} parent=0
    _
  %s10 = ssub.s32 1, %s8
  %s11 = scalar_select 0, %s10, %s8
  $region1: #{positionwise_ffn.1} parent=0
    #allocation3 [shape = 'u8[8192]{0}', space=vmem, size = 0x2000, scoped, tag = 'output window, operand 0']
    #allocation4 [shape = 's32[2]{0}', space=sflag, size = 0x8, scoped, tag = 'scoped memory for positionwise_ffn.1']
    %12 = vsyncpa [#allocation4], 0
    %s13 = scalar_lea.sflag [#allocation4], 1
    %14 = vsyncpa %s13, 0
    loop: start=0, step=1, limit=4
    $region2: #{positionwise_ffn.1} parent=1 // loop_pre_header
      _
    $region3: #{positionwise_ffn.1} parent=1 // loop_header
      %s16 = sphi 0, %s20
      %p17 = scmp.ge.s32.totalorder %s16, 4
      %s23 = sphi 0, %s35
      %s24 = sphi 0, %s31
      %s25 = sphi 0, %s23
      %s26 = sphi 0, %s24
      %s27 = sphi 0, %s25
      %s28 = sphi 0, %s26
      %s38 = sphi 0, %s40
      %s41 = sphi 0, %s38
      %s42 = sphi 0, %s41
      %s58 = sphi 0, %s42
      %s64 = sphi 0, %s66
      %s67 = sphi 0, %s64
      %s68 = sphi 0, %s67
      %s84 = sphi 0, %s68
      %s90 = sphi 0, %s92
      %s93 = sphi 0, %s90
      %s94 = sphi 0, %s93
      %s110 = sphi 0, %s94
      %s116 = sphi 0, %s118
      %s119 = sphi 0, %s116
      %s120 = sphi 0, %s119
      %s136 = sphi 0, %s120
      %s140 = sphi 0, %s140
      %s142 = sphi 0, %s140
      %s143 = sphi 0, %s142
      %s157 = sphi 0, %s143
      %s161 = sphi 0, %s161
      %s163 = sphi 0, %s161
      %s164 = sphi 0, %s163
      %s178 = sphi 0, %s164
      %s182 = sphi 0, %s182
      %s184 = sphi 0, %s182
      %s185 = sphi 0, %s184
      %s199 = sphi 0, %s185
      %s205 = sphi 0, %s207
      %s208 = sphi 0, %s205
      %s209 = sphi 0, %s208
      %s225 = sphi 0, %s209
    $region4: #{positionwise_ffn.1} parent=1 // loop_header_branch
      %19 = sbr.rel (%p17) target = $region8
    $region5: #{positionwise_ffn.1} parent=1 // loop_body
      %s21 = ssub.s32 %s16, 1
      %s22 = ssub.s32 %s16, 2
      %s29 = sadd.s32 1, %s24
      %p30 = scmp.ge.s32.totalorder %s29, 1
      %s31 = scalar_select %p30, 0, %s29
      %s32 = sadd.s32 1, %s23
      %s33 = scalar_select %p30, %s32, %s23
      %p34 = scmp.ge.s32.totalorder %s33, 2
      %s35 = scalar_select %p34, 0, %s33
      %s36 = ssub.s32 %s23, %s35
      %p37 = scmp.eq.s32.totalorder %s36, 0
      %s39 = sadd.s32 %s38, 1
      %s40 = scalar_select %p37, %s38, %s39
      %p43 = pneg %p37
      %p44 = scmp.eq.s32.totalorder %s16, 1
      %p45 = por %p43, %p44
      %p46 = scmp.ne.s32.totalorder %s38, %s41
      %p47 = scmp.eq.s32.totalorder %s16, 0
      %p48 = por %p46, %p47
      %p49 = scmp.ne.s32.totalorder %s38, %s41
      %p50 = scmp.eq.s32.totalorder %s21, 1
      %p51 = por %p49, %p50
      %p52 = scmp.ne.s32.totalorder %s41, %s42
      %p53 = scmp.eq.s32.totalorder %s21, 0
      %p54 = por %p52, %p53
      %p55 = scmp.ne.s32.totalorder %s41, %s42
      %p56 = scmp.eq.s32.totalorder %s22, 1
      %p57 = por %p55, %p56
      %p59 = scmp.ne.s32.totalorder %s42, %s58
      %p60 = scmp.eq.s32.totalorder %s22, 0
      %p61 = por %p59, %p60
      %s62 = ssub.s32 %s24, %s31
      %p63 = scmp.eq.s32.totalorder %s62, 0
      %s65 = sadd.s32 %s64, 1
      %s66 = scalar_select %p63, %s64, %s65
      %p69 = pneg %p63
      %p70 = scmp.eq.s32.totalorder %s16, 1
      %p71 = por %p69, %p70
      %p72 = scmp.ne.s32.totalorder %s64, %s67
      %p73 = scmp.eq.s32.totalorder %s16, 0
      %p74 = por %p72, %p73
      %p75 = scmp.ne.s32.totalorder %s64, %s67
      %p76 = scmp.eq.s32.totalorder %s21, 1
      %p77 = por %p75, %p76
      %p78 = scmp.ne.s32.totalorder %s67, %s68
      %p79 = scmp.eq.s32.totalorder %s21, 0
      %p80 = por %p78, %p79
      %p81 = scmp.ne.s32.totalorder %s67, %s68
      %p82 = scmp.eq.s32.totalorder %s22, 1
      %p83 = por %p81, %p82
      %p85 = scmp.ne.s32.totalorder %s68, %s84
      %p86 = scmp.eq.s32.totalorder %s22, 0
      %p87 = por %p85, %p86
      %s88 = ssub.s32 %s24, %s31
      %p89 = scmp.eq.s32.totalorder %s88, 0
      %s91 = sadd.s32 %s90, 1
      %s92 = scalar_select %p89, %s90, %s91
      %p95 = pneg %p89
      %p96 = scmp.eq.s32.totalorder %s16, 1
      %p97 = por %p95, %p96
      %p98 = scmp.ne.s32.totalorder %s90, %s93
      %p99 = scmp.eq.s32.totalorder %s16, 0
      %p100 = por %p98, %p99
      %p101 = scmp.ne.s32.totalorder %s90, %s93
      %p102 = scmp.eq.s32.totalorder %s21, 1
      %p103 = por %p101, %p102
      %p104 = scmp.ne.s32.totalorder %s93, %s94
      %p105 = scmp.eq.s32.totalorder %s21, 0
      %p106 = por %p104, %p105
      %p107 = scmp.ne.s32.totalorder %s93, %s94
      %p108 = scmp.eq.s32.totalorder %s22, 1
      %p109 = por %p107, %p108
      %p111 = scmp.ne.s32.totalorder %s94, %s110
      %p112 = scmp.eq.s32.totalorder %s22, 0
      %p113 = por %p111, %p112
      %s114 = ssub.s32 %s24, %s31
      %p115 = scmp.eq.s32.totalorder %s114, 0
      %s117 = sadd.s32 %s116, 1
      %s118 = scalar_select %p115, %s116, %s117
      %p121 = pneg %p115
      %p122 = scmp.eq.s32.totalorder %s16, 1
      %p123 = por %p121, %p122
      %p124 = scmp.ne.s32.totalorder %s116, %s119
      %p125 = scmp.eq.s32.totalorder %s16, 0
      %p126 = por %p124, %p125
      %p127 = scmp.ne.s32.totalorder %s116, %s119
      %p128 = scmp.eq.s32.totalorder %s21, 1
      %p129 = por %p127, %p128
      %p130 = scmp.ne.s32.totalorder %s119, %s120
      %p131 = scmp.eq.s32.totalorder %s21, 0
      %p132 = por %p130, %p131
      %p133 = scmp.ne.s32.totalorder %s119, %s120
      %p134 = scmp.eq.s32.totalorder %s22, 1
      %p135 = por %p133, %p134
      %p137 = scmp.ne.s32.totalorder %s120, %s136
      %p138 = scmp.eq.s32.totalorder %s22, 0
      %p139 = por %p137, %p138
      %s141 = sadd.s32 %s140, 1
      %p144 = scmp.eq.s32.totalorder %s16, 1
      %p145 = scmp.ne.s32.totalorder %s140, %s142
      %p146 = scmp.eq.s32.totalorder %s16, 0
      %p147 = por %p145, %p146
      %p148 = scmp.ne.s32.totalorder %s140, %s142
      %p149 = scmp.eq.s32.totalorder %s21, 1
      %p150 = por %p148, %p149
      %p151 = scmp.ne.s32.totalorder %s142, %s143
      %p152 = scmp.eq.s32.totalorder %s21, 0
      %p153 = por %p151, %p152
      %p154 = scmp.ne.s32.totalorder %s142, %s143
      %p155 = scmp.eq.s32.totalorder %s22, 1
      %p156 = por %p154, %p155
      %p158 = scmp.ne.s32.totalorder %s143, %s157
      %p159 = scmp.eq.s32.totalorder %s22, 0
      %p160 = por %p158, %p159
      %s162 = sadd.s32 %s161, 1
      %p165 = scmp.eq.s32.totalorder %s16, 1
      %p166 = scmp.ne.s32.totalorder %s161, %s163
      %p167 = scmp.eq.s32.totalorder %s16, 0
      %p168 = por %p166, %p167
      %p169 = scmp.ne.s32.totalorder %s161, %s163
      %p170 = scmp.eq.s32.totalorder %s21, 1
      %p171 = por %p169, %p170
      %p172 = scmp.ne.s32.totalorder %s163, %s164
      %p173 = scmp.eq.s32.totalorder %s21, 0
      %p174 = por %p172, %p173
      %p175 = scmp.ne.s32.totalorder %s163, %s164
      %p176 = scmp.eq.s32.totalorder %s22, 1
      %p177 = por %p175, %p176
      %p179 = scmp.ne.s32.totalorder %s164, %s178
      %p180 = scmp.eq.s32.totalorder %s22, 0
      %p181 = por %p179, %p180
      %s183 = sadd.s32 %s182, 1
      %p186 = scmp.eq.s32.totalorder %s16, 1
      %p187 = scmp.ne.s32.totalorder %s182, %s184
      %p188 = scmp.eq.s32.totalorder %s16, 0
      %p189 = por %p187, %p188
      %p190 = scmp.ne.s32.totalorder %s182, %s184
      %p191 = scmp.eq.s32.totalorder %s21, 1
      %p192 = por %p190, %p191
      %p193 = scmp.ne.s32.totalorder %s184, %s185
      %p194 = scmp.eq.s32.totalorder %s21, 0
      %p195 = por %p193, %p194
      %p196 = scmp.ne.s32.totalorder %s184, %s185
      %p197 = scmp.eq.s32.totalorder %s22, 1
      %p198 = por %p196, %p197
      %p200 = scmp.ne.s32.totalorder %s185, %s199
      %p201 = scmp.eq.s32.totalorder %s22, 0
      %p202 = por %p200, %p201
      %s203 = ssub.s32 %s23, %s35
      %p204 = scmp.eq.s32.totalorder %s203, 0
      %s206 = sadd.s32 %s205, 1
      %s207 = scalar_select %p204, %s205, %s206
      %p210 = pneg %p204
      %p211 = scmp.eq.s32.totalorder %s16, 1
      %p212 = por %p210, %p211
      %p213 = scmp.ne.s32.totalorder %s205, %s208
      %p214 = scmp.eq.s32.totalorder %s16, 0
      %p215 = por %p213, %p214
      %p216 = scmp.ne.s32.totalorder %s205, %s208
      %p217 = scmp.eq.s32.totalorder %s21, 1
      %p218 = por %p216, %p217
      %p219 = scmp.ne.s32.totalorder %s208, %s209
      %p220 = scmp.eq.s32.totalorder %s21, 0
      %p221 = por %p219, %p220
      %p222 = scmp.ne.s32.totalorder %s208, %s209
      %p223 = scmp.eq.s32.totalorder %s22, 1
      %p224 = por %p222, %p223
      %p226 = scmp.ne.s32.totalorder %s209, %s225
      %p227 = scmp.eq.s32.totalorder %s22, 0
      %p228 = por %p226, %p227
      %p229 = scmp.le.s32.totalorder 1, %s16
      %p230 = scmp.lt.s32.totalorder %s16, 3
      %p231 = pnand %p229, %p230
      %p232 = pneg %p231
      // Predicated region
      $region9: #{positionwise_ffn.1} parent=5 // pred_check
        _
      $region10: #{positionwise_ffn.1} parent=5 // pred_check_branch
        %234 = sbr.rel (%p231) target = $region12
      $region11: #{positionwise_ffn.1} parent=5 // pred_region
        %s235 = ssub.s32 %s16, 1
        // Predicated region
        $region13: #{positionwise_ffn.1} parent=11 // pred_check
          %p236 = pneg %p80
        $region14: #{positionwise_ffn.1} parent=11 // pred_check_branch
          %238 = sbr.rel (%p236) target = $region16
        $region15: #{positionwise_ffn.1} parent=11 // pred_region
          %s239 = smul.u32 2, %s26
          %p240 = scmp.lt.s32.totalorder %s239, 1
          %s241 = scalar_select %p240, %s239, 1
          %s242 = smul.addr %s241, 4
          %s243 = scalar_lea.vmem %s1, %s242
          %s244 = smul.u32 2, %s26
        $region16: #{positionwise_ffn.1} parent=11 // pred_fallthru
          _
        // Predicated region
        $region17: #{positionwise_ffn.1} parent=11 // pred_check
          %p245 = pneg %p106
        $region18: #{positionwise_ffn.1} parent=11 // pred_check_branch
          %247 = sbr.rel (%p245) target = $region20
        $region19: #{positionwise_ffn.1} parent=11 // pred_region
          %s248 = smul.u32 2, %s26
          %p249 = scmp.lt.s32.totalorder %s248, 1
          %s250 = scalar_select %p249, %s248, 1
          %s251 = scalar_lea.vmem %s2, %s250
          %s252 = smul.u32 2, %s26
        $region20: #{positionwise_ffn.1} parent=11 // pred_fallthru
          _
        // Predicated region
        $region21: #{positionwise_ffn.1} parent=11 // pred_check
          %p253 = pneg %p132
        $region22: #{positionwise_ffn.1} parent=11 // pred_check_branch
          %255 = sbr.rel (%p253) target = $region24
        $region23: #{positionwise_ffn.1} parent=11 // pred_region
          %s256 = smul.u32 32, %s26
          %p257 = scmp.lt.s32.totalorder %s256, 31
          %s258 = scalar_select %p257, %s256, 31
          %s259 = smul.addr %s258, 4
          %s260 = scalar_lea.vmem %s3, %s259
          %s261 = smul.u32 32, %s26
        $region24: #{positionwise_ffn.1} parent=11 // pred_fallthru
          _
        // Predicated region
        $region25: #{positionwise_ffn.1} parent=11 // pred_check
          %p262 = pneg %p153
        $region26: #{positionwise_ffn.1} parent=11 // pred_check_branch
          %264 = sbr.rel (%p262) target = $region28
        $region27: #{positionwise_ffn.1} parent=11 // pred_region
          _
        $region28: #{positionwise_ffn.1} parent=11 // pred_fallthru
          _
        // Predicated region
        $region29: #{positionwise_ffn.1} parent=11 // pred_check
          %p265 = pneg %p174
        $region30: #{positionwise_ffn.1} parent=11 // pred_check_branch
          %267 = sbr.rel (%p265) target = $region32
        $region31: #{positionwise_ffn.1} parent=11 // pred_region
          _
        $region32: #{positionwise_ffn.1} parent=11 // pred_fallthru
          _
        // Predicated region
        $region33: #{positionwise_ffn.1} parent=11 // pred_check
          %p268 = pneg %p195
        $region34: #{positionwise_ffn.1} parent=11 // pred_check_branch
          %270 = sbr.rel (%p268) target = $region36
        $region35: #{positionwise_ffn.1} parent=11 // pred_region
          _
        $region36: #{positionwise_ffn.1} parent=11 // pred_fallthru
          _
      $region12: #{positionwise_ffn.1} parent=5 // pred_fallthru
        _
      %p271 = scmp.lt.s32.totalorder %s16, 2
      // Predicated region
      $region37: #{positionwise_ffn.1} parent=5 // pred_check
        %p272 = pneg %p271
      $region38: #{positionwise_ffn.1} parent=5 // pred_check_branch
        %274 = sbr.rel (%p272) target = $region40
      $region39: #{positionwise_ffn.1} parent=5 // pred_region
        // Predicated region
        $region41: #{positionwise_ffn.1} parent=39 // pred_check
          %p275 = pneg %p48
        $region42: #{positionwise_ffn.1} parent=39 // pred_check_branch
          %277 = sbr.rel (%p275) target = $region44
        $region43: #{positionwise_ffn.1} parent=39 // pred_region
          %p278 = scmp.lt.s32.totalorder %s23, 1
          %s279 = scalar_select %p278, %s23, 1
          %s280 = smul.addr %s279, 8
          %s281 = scalar_lea.vmem %s0, %s280
        $region44: #{positionwise_ffn.1} parent=39 // pred_fallthru
          _
      $region40: #{positionwise_ffn.1} parent=5 // pred_fallthru
        _
      %p282 = scmp.le.s32.totalorder 1, %s16
      %p283 = scmp.lt.s32.totalorder %s16, 3
      %p284 = pnand %p282, %p283
      %p285 = pneg %p284
      // Predicated region
      $region45: #{positionwise_ffn.1} parent=5 // pred_check
        _
      $region46: #{positionwise_ffn.1} parent=5 // pred_check_branch
        %287 = sbr.rel (%p284) target = $region48
      $region47: #{positionwise_ffn.1} parent=5 // pred_region
        %s288 = ssub.s32 %s16, 1
        %p289 = scmp.lt.s32.totalorder %s25, 1
        %s290 = scalar_select %p289, %s25, 1
        %s291 = smul.addr %s290, 8
        %s292 = scalar_lea.vmem %s0, %s291
        %p293 = pneg %p54
        %p294 = pneg %p51
        %s295 = smul.u32 2, %s26
        %p296 = scmp.lt.s32.totalorder %s295, 1
        %s297 = scalar_select %p296, %s295, 1
        %s298 = smul.addr %s297, 4
        %s299 = scalar_lea.vmem %s1, %s298
        %p300 = pneg %p80
        %p301 = pneg %p77
        %s302 = smul.u32 2, %s26
        %p303 = scmp.lt.s32.totalorder %s302, 1
        %s304 = scalar_select %p303, %s302, 1
        %s305 = scalar_lea.vmem %s2, %s304
        %p306 = pneg %p106
        %p307 = pneg %p103
        %s308 = smul.u32 32, %s26
        %p309 = scmp.lt.s32.totalorder %s308, 31
        %s310 = scalar_select %p309, %s308, 31
        %s311 = smul.addr %s310, 4
        %s312 = scalar_lea.vmem %s3, %s311
        %p313 = pneg %p132
        %p314 = pneg %p129
        %p315 = pneg %p153
        %p316 = pneg %p150
        %p317 = pneg %p174
        %p318 = pneg %p171
        %p319 = pneg %p195
        %p320 = pneg %p192
        %p321 = pneg %p221
        %p322 = pneg %p218
        %s323 = sand.u32 %s208, 1
        %s324 = scalar_lea.sflag [#allocation4], %s323
        %s325 = sand.u32 %s208, 1
        %s326 = smul.addr %s325, 8
        %s327 = scalar_lea.vmem [#allocation3], %s326
        %p328 = scmp.lt.s32.totalorder %s25, 1
        %s329 = scalar_select %p328, %s25, 1
        %s330 = smul.addr %s329, 8
        %s331 = scalar_lea.vmem %s0, %s330
        %s332 = smul.u32 2, %s26
        %p333 = scmp.lt.s32.totalorder %s332, 1
        %s334 = scalar_select %p333, %s332, 1
        %s335 = smul.addr %s334, 4
        %s336 = scalar_lea.vmem %s1, %s335
        %s337 = smul.u32 2, %s26
        %s338 = smul.u32 2, %s26
        %p339 = scmp.lt.s32.totalorder %s338, 1
        %s340 = scalar_select %p339, %s338, 1
        %s341 = scalar_lea.vmem %s2, %s340
        %s342 = smul.u32 2, %s26
        %s343 = smul.u32 32, %s26
        %p344 = scmp.lt.s32.totalorder %s343, 31
        %s345 = scalar_select %p344, %s343, 31
        %s346 = smul.addr %s345, 4
        %s347 = scalar_lea.vmem %s3, %s346
        %s348 = smul.u32 32, %s26
        %v350 = vld [vmem:[%s331] sm:$0xff]
        %v351 = vpack.c.bf16 %v350, %v350
        %v352 = vld [vmem:[%s336] sm:$0xff]
        %v353 = vld [vmem:[%s336 + $0x8] sm:$0xff]
        %v354 = vld [vmem:[%s336 + $0x10] sm:$0xff]
        %v355 = vld [vmem:[%s336 + $0x18] sm:$0xff]
        %v356 = vld [vmem:[%s336 + $0x20] sm:$0xff]
        %v357 = vld [vmem:[%s336 + $0x28] sm:$0xff]
        %v358 = vld [vmem:[%s336 + $0x30] sm:$0xff]
        %v359 = vld [vmem:[%s336 + $0x38] sm:$0xff]
        %v360 = vld [vmem:[%s336 + $0x40] sm:$0xff]
        %v361 = vld [vmem:[%s336 + $0x48] sm:$0xff]
        %v362 = vld [vmem:[%s336 + $0x50] sm:$0xff]
        %v363 = vld [vmem:[%s336 + $0x58] sm:$0xff]
        %v364 = vld [vmem:[%s336 + $0x60] sm:$0xff]
        %v365 = vld [vmem:[%s336 + $0x68] sm:$0xff]
        %v366 = vld [vmem:[%s336 + $0x70] sm:$0xff]
        %v367 = vld [vmem:[%s336 + $0x78] sm:$0xff]
        %v368 = vld [vmem:[%s341] sm:$0x3]
        %v370 = vlaneseq
        %v371 = vshrl.u32 %v370, 7
        %v372 = vsub.s32 0, %v371
        %v373 = vrot.slane %v368, %v372
        %v374 = vlaneseq
        %v375 = vshrl.u32 %v374, 7
        %v376 = vsub.s32 1, %v375
        %v377 = vrot.slane %v368, %v376
        %v396 = vunpack.c.l.b16 %v352
        %v397 = vunpack.c.h.b16 %v352
        %v398 = vunpack.c.l.b16 %v353
        %v399 = vunpack.c.h.b16 %v353
        %v400 = vunpack.c.l.b16 %v354
        %v401 = vunpack.c.h.b16 %v354
        %v402 = vunpack.c.l.b16 %v355
        %v403 = vunpack.c.h.b16 %v355
        %v404 = vunpack.c.l.b16 %v356
        %v405 = vunpack.c.h.b16 %v356
        %v406 = vunpack.c.l.b16 %v357
        %v407 = vunpack.c.h.b16 %v357
        %v408 = vunpack.c.l.b16 %v358
        %v409 = vunpack.c.h.b16 %v358
        %v410 = vunpack.c.l.b16 %v359
        %v411 = vunpack.c.h.b16 %v359
        %v412 = vunpack.c.l.b16 %v360
        %v413 = vunpack.c.h.b16 %v360
        %v414 = vunpack.c.l.b16 %v361
        %v415 = vunpack.c.h.b16 %v361
        %v416 = vunpack.c.l.b16 %v362
        %v417 = vunpack.c.h.b16 %v362
        %v418 = vunpack.c.l.b16 %v363
        %v419 = vunpack.c.h.b16 %v363
        %v420 = vunpack.c.l.b16 %v364
        %v421 = vunpack.c.h.b16 %v364
        %v422 = vunpack.c.l.b16 %v365
        %v423 = vunpack.c.h.b16 %v365
        %v424 = vunpack.c.l.b16 %v366
        %v425 = vunpack.c.h.b16 %v366
        %v426 = vunpack.c.l.b16 %v367
        %v427 = vunpack.c.h.b16 %v367
        %v428 = vpack.c.b16 %v398, %v396
        %v429 = vpack.c.b16 %v399, %v397
        %v430 = vpack.c.b16 %v402, %v400
        %v431 = vpack.c.b16 %v403, %v401
        %v432 = vpack.c.b16 %v406, %v404
        %v433 = vpack.c.b16 %v407, %v405
        %v434 = vpack.c.b16 %v410, %v408
        %v435 = vpack.c.b16 %v411, %v409
        %v436 = vpack.c.b16 %v414, %v412
        %v437 = vpack.c.b16 %v415, %v413
        %v438 = vpack.c.b16 %v418, %v416
        %v439 = vpack.c.b16 %v419, %v417
        %v440 = vpack.c.b16 %v422, %v420
        %v441 = vpack.c.b16 %v423, %v421
        %v442 = vpack.c.b16 %v426, %v424
        %v443 = vpack.c.b16 %v427, %v425
        %460 = vmatprep.subr.bf16.mxu0 %v429
        %461 = vmatpush1.bf16.msra.mxu0 %v428
        %462 = vmatprep.subr.bf16.mxu0 %v431
        %463 = vmatpush1.bf16.msra.mxu0 %v430
        %464 = vmatprep.subr.bf16.mxu0 %v433
        %465 = vmatpush1.bf16.msra.mxu0 %v432
        %466 = vmatprep.subr.bf16.mxu0 %v435
        %467 = vmatpush1.bf16.msra.mxu0 %v434
        %468 = vmatprep.subr.bf16.mxu0 %v437
        %469 = vmatpush1.bf16.msra.mxu0 %v436
        %470 = vmatprep.subr.bf16.mxu0 %v439
        %471 = vmatpush1.bf16.msra.mxu0 %v438
        %472 = vmatprep.subr.bf16.mxu0 %v441
        %473 = vmatpush1.bf16.msra.mxu0 %v440
        %474 = vmatprep.subr.bf16.mxu0 %v443
        %475 = vmatpush1.bf16.msra.mxu0 %v442
        %476 = vmatprep.subr.bf16.mxu0 0
        %477 = vmatpush1.bf16.msra.mxu0 0
        %478 = vmatprep.subr.bf16.mxu0 0
        %479 = vmatpush1.bf16.msra.mxu0 0
        %480 = vmatprep.subr.bf16.mxu0 0
        %481 = vmatpush1.bf16.msra.mxu0 0
        %482 = vmatprep.subr.bf16.mxu0 0
        %483 = vmatpush1.bf16.msra.mxu0 0
        %484 = vmatprep.subr.bf16.mxu0 0
        %485 = vmatpush1.bf16.msra.mxu0 0
        %486 = vmatprep.subr.bf16.mxu0 0
        %487 = vmatpush1.bf16.msra.mxu0 0
        %488 = vmatprep.subr.bf16.mxu0 0
        %489 = vmatpush1.bf16.msra.mxu0 0
        %490 = vmatprep.subr.bf16.mxu0 0
        %491 = vmatpush1.bf16.msra.mxu0 0
        %492 = vmatprep.mubr.bf16.mxu0 0
        %493 = vmatmul.mubr.bf16.gmra.mrb[0].mxu0 %v351
        %v494 = vpop.f32.mrb[0].mxu0
        %v495 = vadd.f32 %v373, %v494
        %v496 = vpop.f32.mrb[0].mxu0
        %v497 = vadd.f32 %v377, %v496
        %v498 = vpop.f32.mrb[0].mxu0
        %v499 = vpop.f32.mrb[0].mxu0
        %500 = vdwg.mxu0
        %v501 = vmax.f32 %v495, 0.0
        %v502 = vmax.f32 %v497, 0.0
        %v503 = vpack.c.bf16 %v501, %v501
        %v504 = vpack.c.bf16 %v502, %v502
        %v505 = vld [vmem:[%s347] sm:$0xf]
        %v506 = vld [vmem:[%s347 + $0x4] sm:$0xf]
        %v507 = vld [vmem:[%s347 + $0x8] sm:$0xf]
        %v508 = vld [vmem:[%s347 + $0xc] sm:$0xf]
        %v509 = vld [vmem:[%s347 + $0x10] sm:$0xf]
        %v510 = vld [vmem:[%s347 + $0x14] sm:$0xf]
        %v511 = vld [vmem:[%s347 + $0x18] sm:$0xf]
        %v512 = vld [vmem:[%s347 + $0x1c] sm:$0xf]
        %v513 = vld [vmem:[%s347 + $0x20] sm:$0xf]
        %v514 = vld [vmem:[%s347 + $0x24] sm:$0xf]
        %v515 = vld [vmem:[%s347 + $0x28] sm:$0xf]
        %v516 = vld [vmem:[%s347 + $0x2c] sm:$0xf]
        %v517 = vld [vmem:[%s347 + $0x30] sm:$0xf]
        %v518 = vld [vmem:[%s347 + $0x34] sm:$0xf]
        %v519 = vld [vmem:[%s347 + $0x38] sm:$0xf]
        %v520 = vld [vmem:[%s347 + $0x3c] sm:$0xf]
        %v521 = vld [vmem:[%s347 + $0x40] sm:$0xf]
        %v522 = vld [vmem:[%s347 + $0x44] sm:$0xf]
        %v523 = vld [vmem:[%s347 + $0x48] sm:$0xf]
        %v524 = vld [vmem:[%s347 + $0x4c] sm:$0xf]
        %v525 = vld [vmem:[%s347 + $0x50] sm:$0xf]
        %v526 = vld [vmem:[%s347 + $0x54] sm:$0xf]
        %v527 = vld [vmem:[%s347 + $0x58] sm:$0xf]
        %v528 = vld [vmem:[%s347 + $0x5c] sm:$0xf]
        %v529 = vld [vmem:[%s347 + $0x60] sm:$0xf]
        %v530 = vld [vmem:[%s347 + $0x64] sm:$0xf]
        %v531 = vld [vmem:[%s347 + $0x68] sm:$0xf]
        %v532 = vld [vmem:[%s347 + $0x6c] sm:$0xf]
        %v533 = vld [vmem:[%s347 + $0x70] sm:$0xf]
        %v534 = vld [vmem:[%s347 + $0x74] sm:$0xf]
        %v535 = vld [vmem:[%s347 + $0x78] sm:$0xf]
        %v536 = vld [vmem:[%s347 + $0x7c] sm:$0xf]
        %v569 = vunpack.c.l.b16 %v505
        %v570 = vunpack.c.l.b16 %v506
        %v571 = vunpack.c.l.b16 %v507
        %v572 = vunpack.c.l.b16 %v508
        %v573 = vunpack.c.l.b16 %v509
        %v574 = vunpack.c.l.b16 %v510
        %v575 = vunpack.c.l.b16 %v511
        %v576 = vunpack.c.l.b16 %v512
        %v577 = vunpack.c.l.b16 %v513
        %v578 = vunpack.c.l.b16 %v514
        %v579 = vunpack.c.l.b16 %v515
        %v580 = vunpack.c.l.b16 %v516
        %v581 = vunpack.c.l.b16 %v517
        %v582 = vunpack.c.l.b16 %v518
        %v583 = vunpack.c.l.b16 %v519
        %v584 = vunpack.c.l.b16 %v520
        %v585 = vunpack.c.l.b16 %v521
        %v586 = vunpack.c.l.b16 %v522
        %v587 = vunpack.c.l.b16 %v523
        %v588 = vunpack.c.l.b16 %v524
        %v589 = vunpack.c.l.b16 %v525
        %v590 = vunpack.c.l.b16 %v526
        %v591 = vunpack.c.l.b16 %v527
        %v592 = vunpack.c.l.b16 %v528
        %v593 = vunpack.c.l.b16 %v529
        %v594 = vunpack.c.l.b16 %v530
        %v595 = vunpack.c.l.b16 %v531
        %v596 = vunpack.c.l.b16 %v532
        %v597 = vunpack.c.l.b16 %v533
        %v598 = vunpack.c.l.b16 %v534
        %v599 = vunpack.c.l.b16 %v535
        %v600 = vunpack.c.l.b16 %v536
        %v601 = vpack.c.b16 %v570, %v569
        %v602 = vpack.c.b16 %v572, %v571
        %v603 = vpack.c.b16 %v574, %v573
        %v604 = vpack.c.b16 %v576, %v575
        %v605 = vpack.c.b16 %v578, %v577
        %v606 = vpack.c.b16 %v580, %v579
        %v607 = vpack.c.b16 %v582, %v581
        %v608 = vpack.c.b16 %v584, %v583
        %v609 = vpack.c.b16 %v586, %v585
        %v610 = vpack.c.b16 %v588, %v587
        %v611 = vpack.c.b16 %v590, %v589
        %v612 = vpack.c.b16 %v592, %v591
        %v613 = vpack.c.b16 %v594, %v593
        %v614 = vpack.c.b16 %v596, %v595
        %v615 = vpack.c.b16 %v598, %v597
        %v616 = vpack.c.b16 %v600, %v599
        %633 = vmatprep.subr.bf16.mxu0 0
        %634 = vmatpush1.bf16.msra.mxu0 %v601
        %635 = vmatprep.subr.bf16.mxu0 0
        %636 = vmatpush1.bf16.msra.mxu0 %v602
        %637 = vmatprep.subr.bf16.mxu0 0
        %638 = vmatpush1.bf16.msra.mxu0 %v603
        %639 = vmatprep.subr.bf16.mxu0 0
        %640 = vmatpush1.bf16.msra.mxu0 %v604
        %641 = vmatprep.subr.bf16.mxu0 0
        %642 = vmatpush1.bf16.msra.mxu0 %v605
        %643 = vmatprep.subr.bf16.mxu0 0
        %644 = vmatpush1.bf16.msra.mxu0 %v606
        %645 = vmatprep.subr.bf16.mxu0 0
        %646 = vmatpush1.bf16.msra.mxu0 %v607
        %647 = vmatprep.subr.bf16.mxu0 0
        %648 = vmatpush1.bf16.msra.mxu0 %v608
        %649 = vmatprep.subr.bf16.mxu0 0
        %650 = vmatpush1.bf16.msra.mxu0 %v609
        %651 = vmatprep.subr.bf16.mxu0 0
        %652 = vmatpush1.bf16.msra.mxu0 %v610
        %653 = vmatprep.subr.bf16.mxu0 0
        %654 = vmatpush1.bf16.msra.mxu0 %v611
        %655 = vmatprep.subr.bf16.mxu0 0
        %656 = vmatpush1.bf16.msra.mxu0 %v612
        %657 = vmatprep.subr.bf16.mxu0 0
        %658 = vmatpush1.bf16.msra.mxu0 %v613
        %659 = vmatprep.subr.bf16.mxu0 0
        %660 = vmatpush1.bf16.msra.mxu0 %v614
        %661 = vmatprep.subr.bf16.mxu0 0
        %662 = vmatpush1.bf16.msra.mxu0 %v615
        %663 = vmatprep.subr.bf16.mxu0 0
        %664 = vmatpush1.bf16.msra.mxu0 %v616
        %665 = vmatprep.mubr.bf16.mxu0 %v504
        %666 = vmatmul.mubr.bf16.gmra.mrb[0].mxu0 %v503
        %v667 = vpop.f32.mrb[0].mxu0
        %v668 = vadd.f32 0.0, %v667
        %v669 = vpop.f32.mrb[0].mxu0
        %v670 = vpop.f32.mrb[0].mxu0
        %v671 = vpop.f32.mrb[0].mxu0
        %672 = vdwg.mxu0
        %p673 = scmp.eq.s32.totalorder %s26, 0
        // Predicated region
        $region49: #{positionwise_ffn.1} parent=47 // pred_check
          %p674 = pneg %p673
        $region50: #{positionwise_ffn.1} parent=47 // pred_check_branch
          %676 = sbr.rel (%p674) target = $region52
        $region51: #{positionwise_ffn.1} parent=47 // pred_region
          %677 = vst [vmem:[#allocation2] sm:$0xff] %v668
        $region52: #{positionwise_ffn.1} parent=47 // pred_fallthru
          _
        %p678 = scmp.ne.s32.totalorder %s26, 0
        // Predicated region
        $region53: #{positionwise_ffn.1} parent=47 // pred_check
          %p679 = pneg %p678
        $region54: #{positionwise_ffn.1} parent=47 // pred_check_branch
          %681 = sbr.rel (%p679) target = $region56
        $region55: #{positionwise_ffn.1} parent=47 // pred_region
          %v682 = vld [vmem:[#allocation2] sm:$0xff]
          %v683 = vadd.f32 %v682, %v668
          %684 = vst [vmem:[#allocation2] sm:$0xff] %v683
        $region56: #{positionwise_ffn.1} parent=47 // pred_fallthru
          _
        // Predicated region
        $region57: #{positionwise_ffn.1} parent=47 // pred_check
          %p685 = pneg %p673
        $region58: #{positionwise_ffn.1} parent=47 // pred_check_branch
          %687 = sbr.rel (%p685) target = $region60
        $region59: #{positionwise_ffn.1} parent=47 // pred_region
          %v688 = vld [vmem:[#allocation2] sm:$0xff]
          %v689 = vld [vmem:[%s4] sm:$0x1]
          %v691 = vlaneseq
          %v692 = vshrl.u32 %v691, 7
          %v693 = vsub.s32 0, %v692
          %v694 = vrot.slane %v689, %v693
          %v696 = vadd.f32 %v688, %v694
          %v697 = vadd.f32 %v696, %v350
          %698 = vadd.xlane.f32.xlu0 %v697
          %v699 = vpop.xlane.xlu0 %698
          %v700 = vmul.f32 %v699, 0.0078125
          %v701 = vmul.f32 %v697, %v697
          %702 = vadd.xlane.f32.xlu0 %v701
          %v703 = vpop.xlane.xlu0 %702
          %v704 = vmul.f32 %v703, 0.0078125
          %v705 = vmul.f32 %v700, %v700
          %v706 = vsub.f32 %v704, %v705
          %v707 = vmax.f32 %v706, 0.0
          %v708 = vsub.f32 %v697, %v700
          %v709 = vadd.f32 %v707, 1e-05
          %v710 = vrsqrt.pop %v709
          %v711 = vmul.f32 %v708, %v710
          %v712 = vld [vmem:[%s5] sm:$0x1]
          %v714 = vlaneseq
          %v715 = vshrl.u32 %v714, 7
          %v716 = vsub.s32 0, %v715
          %v717 = vrot.slane %v712, %v716
          %v719 = vmul.f32 %v711, %v717
          %v720 = vld [vmem:[%s6] sm:$0x1]
          %v722 = vlaneseq
          %v723 = vshrl.u32 %v722, 7
          %v724 = vsub.s32 0, %v723
          %v725 = vrot.slane %v720, %v724
          %v727 = vadd.f32 %v719, %v725
          %728 = vst [vmem:[%s327] sm:$0xff] %v727
        $region60: #{positionwise_ffn.1} parent=47 // pred_fallthru
          _
        %s729 = sand.u32 %s208, 1
        %s730 = scalar_lea.sflag [#allocation4], %s729
        %s731 = sand.u32 %s208, 1
        %s732 = smul.addr %s731, 8
        %s733 = scalar_lea.vmem [#allocation3], %s732
        // Predicated region
        $region61: #{positionwise_ffn.1} parent=47 // pred_check
          %p734 = pneg %p218
        $region62: #{positionwise_ffn.1} parent=47 // pred_check_branch
          %736 = sbr.rel (%p734) target = $region64
        $region63: #{positionwise_ffn.1} parent=47 // pred_region
          %s738 = ssub.s32 128, 128
          %739 = vsyncadd %s730, %s738
          %s740 = smul.addr %s25, 128
          %s741 = scalar_lea.hbm %s7, %s740
          %s743 = sshll.u32 %s733, 4
          %s744 = int_to_ptr.vmem [resolvable:$true] %s743
          %746 = dma.vmem_to_hbm [thread:$0]  %s744, 128, %s741, %s730
        $region64: #{positionwise_ffn.1} parent=47 // pred_fallthru
          _
      $region48: #{positionwise_ffn.1} parent=5 // pred_fallthru
        _
      %p747 = scmp.le.s32.totalorder 2, %s16
      // Predicated region
      $region65: #{positionwise_ffn.1} parent=5 // pred_check
        %p748 = pneg %p747
      $region66: #{positionwise_ffn.1} parent=5 // pred_check_branch
        %750 = sbr.rel (%p748) target = $region68
      $region67: #{positionwise_ffn.1} parent=5 // pred_region
        %s751 = ssub.s32 %s16, 2
        // Predicated region
        $region69: #{positionwise_ffn.1} parent=67 // pred_check
          %p752 = pneg %p224
        $region70: #{positionwise_ffn.1} parent=67 // pred_check_branch
          %754 = sbr.rel (%p752) target = $region72
        $region71: #{positionwise_ffn.1} parent=67 // pred_region
          %s755 = sand.u32 %s209, 1
          %s756 = scalar_lea.sflag [#allocation4], %s755
          %s757 = sand.u32 %s209, 1
          %s758 = smul.addr %s757, 8
          %s759 = scalar_lea.vmem [#allocation3], %s758
          %760 = dma.done %s756, 128
        $region72: #{positionwise_ffn.1} parent=67 // pred_fallthru
          _
      $region68: #{positionwise_ffn.1} parent=5 // pred_fallthru
        _
    $region6: #{positionwise_ffn.1} parent=1 // loop_footer
      %s20 = sadd.s32 1, %s16
    $region7: #{positionwise_ffn.1} parent=1 // loop_footer_branch
      %15 = sbr.rel target = $region3
    $region8: #{positionwise_ffn.1} parent=1 // loop_exit
      _
    %761 = vsyncpa [#allocation4], 1
    %s762 = scalar_lea.sflag [#allocation4], 1
    %763 = vsyncpa %s762, 1

</llo_original>
